<compile_context>
chip_gen: v6e
topology: v6e:2x2x1
jax: 0.10.0
libtpu: 0.0.40
codegen_flags: <defaults>
</compile_context>

<pallas_src>
import functools

import jax
import jax.numpy as jnp
from jax.experimental import pallas as pl
from jax.experimental.pallas import tpu as pltpu


# ---------------------------------------------------------------------------
# Kernels: one (block_rows, S*D) tile per grid step, purely elementwise.
# ---------------------------------------------------------------------------

def _add_pos_kernel(x_ref, pos_ref, o_ref):
    # x_ref: (block_rows, S*D)   pos_ref: (1, S*D), constant index_map -> resident
    o_ref[...] = x_ref[...] + pos_ref[...]


def _add_pos_dropout_kernel(keep_threshold_u32, inv_keep,
                            x_ref, pos_ref, bits_ref, o_ref):
    y = x_ref[...] + pos_ref[...]
    # keep iff uint32 bits >= p * 2^32  (single full-width unsigned compare)
    keep = bits_ref[...] >= jnp.uint32(keep_threshold_u32)
    scale = jnp.asarray(inv_keep, dtype=y.dtype)
    o_ref[...] = jnp.where(keep, y * scale, jnp.zeros_like(y))


# ---------------------------------------------------------------------------
# Per-generation tiling policy.
# ---------------------------------------------------------------------------

def _device_policy():
    """Best-effort generation detection; conservative defaults if unknown."""
    try:
        kind = jax.devices()[0].device_kind.lower()
    except Exception:  # pragma: no cover
        kind = ""
    if "v7" in kind:
        # 64 MiB physical VMEM, 2 TensorCores, fast HBM -> bigger tiles, even grid.
        return dict(vmem_budget=32 << 20, vmem_cap=48 << 20, want_even_grid=True)
    if "v5" in kind or "v6" in kind:
        # 128 MiB physical VMEM, single TensorCore -> just keep tiles big.
        return dict(vmem_budget=64 << 20, vmem_cap=100 << 20, want_even_grid=False)
    # Unknown device (incl. CPU interpret): conservative.
    return dict(vmem_budget=24 << 20, vmem_cap=48 << 20, want_even_grid=False)


def _pick_block_rows(batch, row_elems, itemsize, *, dropout,
                     vmem_budget, want_even_grid):
    """Rows (= batch elements) per grid step, sized from the VMEM budget.

    Per-row VMEM: double-buffered input + double-buffered output
    (+ double-buffered uint32 mask bits when dropout is on).
    """
    per_row = 2 * row_elems * (2 * itemsize + (4 if dropout else 0))
    cand = max(1, int(vmem_budget // per_row))
    if cand >= batch:
        block_rows = batch                       # single (or few) full blocks
    else:
        # keep sublane dim a multiple of 8 when it is not the full batch
        block_rows = min(batch, max(8, (cand // 8) * 8))

    if want_even_grid and batch >= 16 and block_rows >= 16 and block_rows < batch:
        g = pl.cdiv(batch, block_rows)
        if g % 2:                                # prefer an even grid on 2 TCs
            g += 1
            block_rows = min(batch, max(8, ((pl.cdiv(batch, g) + 7) // 8) * 8))
    return block_rows


# ---------------------------------------------------------------------------
# Wrapper.
# ---------------------------------------------------------------------------

def cross_embeddings_forward(concat_embeddings, position_table, *,
                             p_drop=0.0, training=False, rng_key=None,
                             block_rows=None):
    """Pallas equivalent of CrossEmbeddings.forward.

    concat_embeddings: (B, S, D)
    position_table:    (num_positions, D) with num_positions >= S
    """
    B, S, D = concat_embeddings.shape
    assert position_table.shape[0] >= S and position_table.shape[1] == D
    dtype = concat_embeddings.dtype
    row_elems = S * D

    # position_ids = arange(S) -> the lookup is just the first S rows of the table.
    pos = position_table[:S].astype(dtype)                       # (S, D)

    # Lane-dense 2D layout: feature*seq on lanes, batch on sublanes.
    x2 = concat_embeddings.reshape(B, row_elems)                 # (B, S*D)
    pos2 = pos.reshape(1, row_elems)                             # (1, S*D)

    apply_dropout = bool(training) and float(p_drop) > 0.0
    if apply_dropout:
        assert float(p_drop) < 1.0, "p_drop must be < 1.0 in training mode"
        if rng_key is None:
            rng_key = jax.random.PRNGKey(0)

    policy = _device_policy()
    itemsize = jnp.dtype(dtype).itemsize
    if block_rows is None:
        block_rows = _pick_block_rows(B, row_elems, itemsize,
                                      dropout=apply_dropout,
                                      vmem_budget=policy["vmem_budget"],
                                      want_even_grid=policy["want_even_grid"])
    grid = (pl.cdiv(B, block_rows),)

    # Derive the VMEM limit from the actual allocation (+ slack), clip to cap.
    per_block = 2 * block_rows * row_elems * (2 * itemsize
                                              + (4 if apply_dropout else 0))
    per_block += 2 * row_elems * itemsize                        # pos (small)
    vmem_limit = int(min(policy["vmem_cap"],
                         max(per_block + (2 << 20), 16 << 20)))

    in_specs = [
        pl.BlockSpec((block_rows, row_elems), lambda b: (b, 0)),
        pl.BlockSpec((1, row_elems), lambda b: (0, 0)),          # resident
    ]
    args = [x2, pos2]

    if apply_dropout:
        threshold = min(int(round(float(p_drop) * (1 << 32))), (1 << 32) - 1)
        kernel = functools.partial(_add_pos_dropout_kernel,
                                   threshold, 1.0 / (1.0 - float(p_drop)))
        bits = jax.random.bits(rng_key, (B, row_elems), dtype=jnp.uint32)
        in_specs.append(pl.BlockSpec((block_rows, row_elems), lambda b: (b, 0)))
        args.append(bits)
    else:
        kernel = _add_pos_kernel

    out2 = pl.pallas_call(
        kernel,
        out_shape=jax.ShapeDtypeStruct((B, row_elems), dtype),
        grid=grid,
        in_specs=in_specs,
        out_specs=pl.BlockSpec((block_rows, row_elems), lambda b: (b, 0)),
        compiler_params=pltpu.CompilerParams(
            dimension_semantics=("parallel",),
            vmem_limit_bytes=vmem_limit,
        ),
    )(*args)

    return out2.reshape(B, S, D)


# ---------------------------------------------------------------------------
# Demo / self-test.
# ---------------------------------------------------------------------------

if __name__ == "__main__":
    # Small shapes consistent with the module: batch=2, seq=8, hidden=32,
    # 66-entry position table, hidden_dropout_prob = 0.1.
    B, S, D = 2, 8, 32
    NUM_POSITIONS = 66
    HIDDEN_DROPOUT_PROB = 0.1

    key = jax.random.PRNGKey(0)
    kx, kp = jax.random.split(key)
    concat_embeddings = jax.random.normal(kx, (B, S, D), jnp.float32)
    position_table = jax.random.normal(kp, (NUM_POSITIONS, D), jnp.float32) * 0.02

    ref = concat_embeddings + position_table[:S][None, :, :]

    # --- eval mode (dropout == identity): must match the reference ---
    out = cross_embeddings_forward(concat_embeddings, position_table,
                                   p_drop=HIDDEN_DROPOUT_PROB, training=False)
    out = jax.block_until_ready(out)
    assert out.shape == (B, S, D)
    assert jnp.allclose(out, ref, atol=1e-6, rtol=1e-6), "eval-mode mismatch"

    # --- training mode: dropout mask from jax.random bits (deterministic) ---
    drop_key = jax.random.PRNGKey(1234)
    out_tr = cross_embeddings_forward(concat_embeddings, position_table,
                                      p_drop=HIDDEN_DROPOUT_PROB, training=True,
                                      rng_key=drop_key)
    out_tr = jax.block_until_ready(out_tr)
    assert out_tr.shape == (B, S, D)

    # Reproduce the exact expected result from the same bits.
    bits = jax.random.bits(drop_key, (B, S * D), dtype=jnp.uint32).reshape(B, S, D)
    thr = jnp.uint32(int(round(HIDDEN_DROPOUT_PROB * (1 << 32))))
    keep = bits >= thr
    expected = jnp.where(keep, ref / (1.0 - HIDDEN_DROPOUT_PROB), 0.0)
    assert bool(jnp.all(jnp.isfinite(out_tr)))
    assert jnp.allclose(out_tr, expected, atol=1e-5, rtol=1e-5), "train-mode mismatch"

    print("KERNEL_OK")
</pallas_src>

<mosaic_0001>
module attributes {stable_mosaic.version = 11 : i64} {
  func.func @_add_pos_kernel(%arg0: i32, %arg1: memref<2x256xf32, #tpu.memory_space<vmem>>, %arg2: memref<1x256xf32, #tpu.memory_space<vmem>>, %arg3: memref<2x256xf32, #tpu.memory_space<vmem>>) attributes {dimension_semantics = [#tpu.dimension_semantics<parallel>], iteration_bounds = array<i64: 1>, scalar_prefetch = 0 : i64, scratch_operands = 0 : i64, tpu.core_type = #tpu.core_type<tc>, window_params = [{transform_indices = @transform_0, window_bounds = array<i64: 2, 256>}, {pipeline_mode = #tpu.pipeline_mode<synchronous>, transform_indices = @transform_1, window_bounds = array<i64: 1, 256>}, {transform_indices = @transform_2, window_bounds = array<i64: 2, 256>}]} {
    %c0 = arith.constant 0 : index
    %c0_0 = arith.constant 0 : index
    %0 = vector.load %arg1[%c0, %c0_0] : memref<2x256xf32, #tpu.memory_space<vmem>>, vector<2x256xf32>
    %c0_1 = arith.constant 0 : index
    %c0_2 = arith.constant 0 : index
    %1 = vector.load %arg2[%c0_1, %c0_2] : memref<1x256xf32, #tpu.memory_space<vmem>>, vector<1x256xf32>
    %2 = vector.broadcast %1 : vector<1x256xf32> to vector<2x256xf32>
    %3 = arith.addf %0, %2 : vector<2x256xf32>
    %c0_3 = arith.constant 0 : index
    %c0_4 = arith.constant 0 : index
    %4 = vector.load %arg3[%c0_3, %c0_4] : memref<2x256xf32, #tpu.memory_space<vmem>>, vector<2x256xf32>
    tpu.vector_store %arg3[%c0_3, %c0_4], %3 {strides = array<i32>} : memref<2x256xf32, #tpu.memory_space<vmem>>, vector<2x256xf32>,
    return
  }
  func.func @transform_0(%arg0: i32) -> (i32, i32) {
    %c0_i32 = arith.constant 0 : i32
    %c0_i32_0 = arith.constant 0 : i32
    return %arg0, %c0_i32 : i32, i32
  }
  func.func @transform_1(%arg0: i32) -> (i32, i32) {
    %c0_i32 = arith.constant 0 : i32
    %c0_i32_0 = arith.constant 0 : i32
    %c0_i32_1 = arith.constant 0 : i32
    return %c0_i32, %c0_i32_0 : i32, i32
  }
  func.func @transform_2(%arg0: i32) -> (i32, i32) {
    %c0_i32 = arith.constant 0 : i32
    %c0_i32_0 = arith.constant 0 : i32
    return %arg0, %c0_i32 : i32, i32
  }
}

</mosaic_0001>

<llo_original>
// kernel: tpu_custom_call.1
$region0: #{tpu_custom_call.1}
  #allocation0 [shape = 'u32[]', space=smem, size = 0x4, offset = 0x4, fixed_abs, tag = 'smem constant byte address 0x4 - core index']
  #allocation1 [shape = 'u32[144,128]{1,0:T(1,128)}', space=vmem, size = 0x12000, scoped, tag = 'internal scratch']
  %s0 = inlined_call_operand.hbm [shape: f32[2,256], index: 0, kind: input, shape index: {}]
  %s1 = inlined_call_operand.hbm [shape: f32[1,256], index: 1, kind: input, shape index: {}]
  %s2 = inlined_call_operand.hbm [shape: f32[2,256], index: 2, kind: output, shape index: {}]
  %s3 = sld [smem:[#allocation0]]
  $region26: #{tpu_custom_call.1} parent=0
    _
  %s5 = ssub.s32 1, %s3
  %s6 = scalar_select 0, %s5, %s3
  $region1: #{tpu_custom_call.1} parent=0
    #allocation2 [shape = 'u8[2048]{0}', space=vmem, size = 0x800, scoped, tag = 'input window, operand 0, single buffered']
    #allocation3 [shape = 's32[1]{0}', space=sflag, size = 0x4, scoped, tag = 'scoped memory for tpu_custom_call.1']
    #allocation4 [shape = 's32[1]{0}', space=sflag, size = 0x4, scoped, tag = 'scoped memory for tpu_custom_call.1']
    #allocation5 [shape = 'u8[1024]{0}', space=vmem, size = 0x400, scoped, tag = 'input window, operand 1, single buffered']
    #allocation6 [shape = 's32[1]{0}', space=sflag, size = 0x4, scoped, tag = 'scoped memory for tpu_custom_call.1']
    #allocation7 [shape = 'u8[2048]{0}', space=vmem, size = 0x800, scoped, tag = 'output window, operand 0, single buffered']
    %7 = vsyncpa [#allocation3], 0
    %8 = vsyncpa [#allocation6], 0
    %9 = vsyncpa [#allocation4], 0
    // Predicated region
    $region2: #{tpu_custom_call.1} parent=1 // pred_check
      _
    $region3: #{tpu_custom_call.1} parent=1 // pred_check_branch
      %11 = sbr.rel (0) target = $region5
    $region4: #{tpu_custom_call.1} parent=1 // pred_region
      %s13 = ssub.s32 64, 64
      %14 = vsyncadd [#allocation3], %s13
      %s16 = sshll.u32 [#allocation2], 4
      %s17 = int_to_ptr.vmem [resolvable:$true] %s16
      %19 = dma.hbm_to_vmem [thread:$0]  %s0, 64, %s17, [#allocation3]
    $region5: #{tpu_custom_call.1} parent=1 // pred_fallthru
      _
    // Predicated region
    $region6: #{tpu_custom_call.1} parent=1 // pred_check
      _
    $region7: #{tpu_custom_call.1} parent=1 // pred_check_branch
      %21 = sbr.rel (0) target = $region9
    $region8: #{tpu_custom_call.1} parent=1 // pred_region
      %s23 = ssub.s32 32, 32
      %24 = vsyncadd [#allocation6], %s23
      %s26 = sshll.u32 [#allocation5], 4
      %s27 = int_to_ptr.vmem [resolvable:$true] %s26
      %29 = dma.hbm_to_vmem [thread:$0]  %s1, 32, %s27, [#allocation6]
    $region9: #{tpu_custom_call.1} parent=1 // pred_fallthru
      _
    // Predicated region
    $region10: #{tpu_custom_call.1} parent=1 // pred_check
      _
    $region11: #{tpu_custom_call.1} parent=1 // pred_check_branch
      %31 = sbr.rel (0) target = $region13
    $region12: #{tpu_custom_call.1} parent=1 // pred_region
      %32 = dma.done [#allocation3], 64
    $region13: #{tpu_custom_call.1} parent=1 // pred_fallthru
      _
    // Predicated region
    $region14: #{tpu_custom_call.1} parent=1 // pred_check
      _
    $region15: #{tpu_custom_call.1} parent=1 // pred_check_branch
      %34 = sbr.rel (0) target = $region17
    $region16: #{tpu_custom_call.1} parent=1 // pred_region
      %35 = dma.done [#allocation6], 32
    $region17: #{tpu_custom_call.1} parent=1 // pred_fallthru
      _
    %v36 = vld [vmem:[#allocation2] sm:$0xf]
    %v37 = vld [vmem:[#allocation5] sm:$0x3]
    %v39 = vlaneseq
    %v40 = vshrl.u32 %v39, 7
    %v41 = vsub.s32 0, %v40
    %v42 = vrot.slane %v37, %v41
    %v43 = vlaneseq
    %v44 = vshrl.u32 %v43, 7
    %v45 = vsub.s32 1, %v44
    %v46 = vrot.slane %v37, %v45
    %v47 = vcombine.low %v42, %v46
    %v49 = vunpack.c.l.s4 1983009808
    %v50 = vunpack.c.0.s8 %v49
    %v51 = vlaneseq
    %v52 = vshrl.u32 %v51, 7
    %v53 = vsub.s32 %v50, %v52
    %v54 = vrot.slane %v47, %v53
    %v56 = vadd.f32 %v36, %v54
    %57 = vst [vmem:[#allocation7] sm:$0xf] %v56
    // Predicated region
    $region18: #{tpu_custom_call.1} parent=1 // pred_check
      _
    $region19: #{tpu_custom_call.1} parent=1 // pred_check_branch
      %59 = sbr.rel (0) target = $region21
    $region20: #{tpu_custom_call.1} parent=1 // pred_region
      %s61 = ssub.s32 64, 64
      %62 = vsyncadd [#allocation4], %s61
      %s64 = sshll.u32 [#allocation7], 4
      %s65 = int_to_ptr.vmem [resolvable:$true] %s64
      %67 = dma.vmem_to_hbm [thread:$0]  %s65, 64, %s2, [#allocation4]
    $region21: #{tpu_custom_call.1} parent=1 // pred_fallthru
      _
    // Predicated region
    $region22: #{tpu_custom_call.1} parent=1 // pred_check
      _
    $region23: #{tpu_custom_call.1} parent=1 // pred_check_branch
      %69 = sbr.rel (0) target = $region25
    $region24: #{tpu_custom_call.1} parent=1 // pred_region
      %70 = dma.done [#allocation4], 64
    $region25: #{tpu_custom_call.1} parent=1 // pred_fallthru
      _
    %71 = vsyncpa [#allocation3], 1
    %72 = vsyncpa [#allocation6], 1
    %73 = vsyncpa [#allocation4], 1

</llo_original>
